<compile_context>
chip_gen: v7x
topology: tpu7x:2x2x1
jax: 0.10.0
libtpu: 0.0.40
codegen_flags: <defaults>
</compile_context>

<pallas_src>
import jax
import jax.numpy as jnp
from jax.experimental import pallas as pl
from jax.experimental.pallas import tpu as pltpu

EPS = 1e-10  # matches nn.InstanceNorm2d(eps=1e-10)

# ~6 MiB per (R, HW) block -> double-buffered in + out ~= 24 MiB: fits v7x (64 MiB
# physical) with headroom and is well under v5e/v6e's 128 MiB. Explicit limit lifts
# the scoped defaults (16/32/32 MiB).
DEFAULT_BLOCK_BYTES = 6 * 1024 * 1024
DEFAULT_VMEM_LIMIT = 48 * 1024 * 1024


def _round_up(v, m):
    return -(-v // m) * m


# --------------------------------------------------------------------------- fused path


def _instnorm_fused_kernel(x_ref, gb_ref, o_ref):
    # x_ref / o_ref: (R, HW) block — R independent (n, c) planes, full plane per row.
    # gb_ref: (R, 2) block — column 0 = gamma, column 1 = beta (per row).
    x = x_ref[...].astype(jnp.float32)
    hw = x.shape[1]
    inv_hw = jnp.float32(1.0 / hw)

    s1 = jnp.sum(x, axis=-1, keepdims=True)          # (R, 1)
    s2 = jnp.sum(x * x, axis=-1, keepdims=True)      # (R, 1)
    mean = s1 * inv_hw
    # Clamp: one-pass variance can go slightly negative in f32 -> NaN via rsqrt.
    var = jnp.maximum(s2 * inv_hw - mean * mean, 0.0)
    inv_std = jax.lax.rsqrt(var + EPS)

    gb = gb_ref[...].astype(jnp.float32)
    a = gb[:, 0:1] * inv_std                         # (R, 1), broadcasts over lanes
    b = gb[:, 1:2] - mean * a                        # (R, 1)
    o_ref[...] = (x * a + b).astype(o_ref.dtype)


def _pick_row_block(nc, hw, target_bytes):
    """Multiple-of-8 row count whose (R, HW) f32 block fits the budget."""
    if nc <= 8:
        return nc  # full second-to-last dim is always a legal block extent
    r = max(8, (target_bytes // (hw * 4)) // 8 * 8)
    # Cap so the grid has >= 2 steps: lets v7x's two TensorCores split the
    # "parallel" axis. (For NC == 8 a single step is structurally unavoidable.)
    r = min(r, _round_up((nc + 1) // 2, 8))
    r = min(r, _round_up(nc, 8))
    return int(r)


def _fused_path(xr, gb, nc, hw, target_block_bytes, vmem_limit_bytes):
    r = _pick_row_block(nc, hw, target_block_bytes)
    grid = (pl.cdiv(nc, r),)

    cost = pl.CostEstimate(
        flops=6 * nc * hw,
        transcendentals=nc,
        bytes_accessed=2 * nc * hw * 4 + 2 * nc * 4,
    )

    return pl.pallas_call(
        _instnorm_fused_kernel,
        out_shape=jax.ShapeDtypeStruct((nc, hw), xr.dtype),
        grid_spec=pltpu.PrefetchScalarGridSpec(
            num_scalar_prefetch=0,
            grid=grid,
            in_specs=[
                pl.BlockSpec((r, hw), lambda i: (i, 0)),   # x rows (lane-dense)
                pl.BlockSpec((r, 2), lambda i: (i, 0)),    # packed gamma/beta
            ],
            out_specs=pl.BlockSpec((r, hw), lambda i: (i, 0)),
        ),
        compiler_params=pltpu.CompilerParams(
            dimension_semantics=("parallel",),
            vmem_limit_bytes=vmem_limit_bytes,
        ),
        cost_estimate=cost,
    )(xr, gb)


# --------------------------------------------------------- HW-tiled two-pass fallback


def _make_stats_kernel(hw_total, hw_block):
    inv_hw = 1.0 / hw_total

    def kernel(x_ref, mean_ref, rstd_ref, s1_ref, s2_ref):
        j = pl.program_id(1)

        @pl.when(j == 0)
        def _():
            s1_ref[...] = jnp.zeros_like(s1_ref)
            s2_ref[...] = jnp.zeros_like(s2_ref)

        x = x_ref[...].astype(jnp.float32)
        if hw_total % hw_block != 0:
            # Last HW block is partially out-of-bounds: zero the padded lanes so
            # they don't contaminate the sums.
            lane = jax.lax.broadcasted_iota(jnp.int32, x.shape, 1) + j * hw_block
            x = jnp.where(lane < hw_total, x, 0.0)

        s1_ref[...] += jnp.sum(x, axis=-1, keepdims=True)
        s2_ref[...] += jnp.sum(x * x, axis=-1, keepdims=True)

        @pl.when(j == pl.num_programs(1) - 1)
        def _():
            mean = s1_ref[...] * jnp.float32(inv_hw)
            var = jnp.maximum(s2_ref[...] * jnp.float32(inv_hw) - mean * mean, 0.0)
            mean_ref[...] = mean
            rstd_ref[...] = jax.lax.rsqrt(var + EPS)

    return kernel


def _apply_kernel(x_ref, mean_ref, rstd_ref, gb_ref, o_ref):
    x = x_ref[...].astype(jnp.float32)
    gb = gb_ref[...].astype(jnp.float32)
    a = gb[:, 0:1] * rstd_ref[...]
    b = gb[:, 1:2] - mean_ref[...] * a
    o_ref[...] = (x * a + b).astype(o_ref.dtype)


def _pick_hw_block(hw, rows, target_bytes):
    max_lanes = max(128, (target_bytes // (rows * 4)) // 128 * 128)
    if hw <= max_lanes:
        return hw  # full last dim
    return int(max_lanes)


def _two_pass_path(xr, gb, nc, hw, target_block_bytes, vmem_limit_bytes):
    rr = nc if nc <= 8 else 8
    hwb = _pick_hw_block(hw, rr, target_block_bytes)
    row_grid = pl.cdiv(nc, rr)
    hw_grid = pl.cdiv(hw, hwb)

    mean, rstd = pl.pallas_call(
        _make_stats_kernel(hw, hwb),
        out_shape=(
            jax.ShapeDtypeStruct((nc, 1), jnp.float32),
            jax.ShapeDtypeStruct((nc, 1), jnp.float32),
        ),
        grid_spec=pltpu.PrefetchScalarGridSpec(
            num_scalar_prefetch=0,
            grid=(row_grid, hw_grid),
            in_specs=[pl.BlockSpec((rr, hwb), lambda i, j: (i, j))],
            out_specs=[
                pl.BlockSpec((rr, 1), lambda i, j: (i, 0)),
                pl.BlockSpec((rr, 1), lambda i, j: (i, 0)),
            ],
            scratch_shapes=[
                pltpu.VMEM((rr, 1), jnp.float32),
                pltpu.VMEM((rr, 1), jnp.float32),
            ],
        ),
        compiler_params=pltpu.CompilerParams(
            dimension_semantics=("parallel", "arbitrary"),
            vmem_limit_bytes=vmem_limit_bytes,
        ),
    )(xr)

    return pl.pallas_call(
        _apply_kernel,
        out_shape=jax.ShapeDtypeStruct((nc, hw), xr.dtype),
        grid_spec=pltpu.PrefetchScalarGridSpec(
            num_scalar_prefetch=0,
            grid=(row_grid, hw_grid),
            in_specs=[
                pl.BlockSpec((rr, hwb), lambda i, j: (i, j)),
                pl.BlockSpec((rr, 1), lambda i, j: (i, 0)),
                pl.BlockSpec((rr, 1), lambda i, j: (i, 0)),
                pl.BlockSpec((rr, 2), lambda i, j: (i, 0)),
            ],
            out_specs=pl.BlockSpec((rr, hwb), lambda i, j: (i, j)),
        ),
        compiler_params=pltpu.CompilerParams(
            dimension_semantics=("parallel", "parallel"),
            vmem_limit_bytes=vmem_limit_bytes,
        ),
    )(xr, mean, rstd, gb)


# ---------------------------------------------------------------------------- wrapper


def instance_norm2d(x, weight, bias, *,
                    target_block_bytes=DEFAULT_BLOCK_BYTES,
                    vmem_limit_bytes=DEFAULT_VMEM_LIMIT):
    """x: (N, C, H, W) float32; weight, bias: (C,) float32."""
    N, C, H, W = x.shape
    NC, HW = N * C, H * W

    # Lane-dense layout: each row is one full (n, c) spatial plane.
    xr = x.reshape(NC, HW)
    # Per-row affine params packed into one array: row n*C + c -> channel c.
    gb = jnp.stack([jnp.tile(weight, N), jnp.tile(bias, N)], axis=-1).astype(jnp.float32)

    min_rows = min(8, NC)
    if min_rows * HW * 4 <= target_block_bytes:
        out = _fused_path(xr, gb, NC, HW, target_block_bytes, vmem_limit_bytes)
    else:
        # Plane too large to hold even the minimum row block: HW-tiled two-pass path.
        out = _two_pass_path(xr, gb, NC, HW, target_block_bytes, vmem_limit_bytes)
    return out.reshape(N, C, H, W)


def _reference(x, weight, bias):
    mean = jnp.mean(x, axis=(2, 3), keepdims=True)
    var = jnp.mean((x - mean) ** 2, axis=(2, 3), keepdims=True)
    xn = (x - mean) / jnp.sqrt(var + EPS)
    return xn * weight[None, :, None, None] + bias[None, :, None, None]


if __name__ == "__main__":
    # Small shapes consistent with the module: CI (num channels) = 4.
    N, CI, H, W = 2, 4, 16, 16

    key = jax.random.PRNGKey(0)
    kx, kw, kb, kx2 = jax.random.split(key, 4)
    x = jax.random.normal(kx, (N, CI, H, W), dtype=jnp.float32)
    weight = jnp.ones((CI,), jnp.float32) + 0.1 * jax.random.normal(kw, (CI,), jnp.float32)
    bias = 0.1 * jax.random.normal(kb, (CI,), jnp.float32)

    ref = _reference(x, weight, bias)

    # Main (fused) path.
    out = jax.block_until_ready(instance_norm2d(x, weight, bias))
    assert out.shape == (N, CI, H, W)
    assert jnp.allclose(out, ref, atol=1e-5, rtol=1e-5), "fused path mismatch"

    # Force the HW-tiled two-pass fallback with a tiny block budget (HW % HWb == 0).
    out_fb = jax.block_until_ready(
        instance_norm2d(x, weight, bias, target_block_bytes=2048))
    assert jnp.allclose(out_fb, ref, atol=1e-5, rtol=1e-5), "fallback path mismatch"

    # Fallback with a spatial plane that is not a multiple of 128 (masked tail block).
    x2 = jax.random.normal(kx2, (1, CI, 18, 18), dtype=jnp.float32)
    out2 = jax.block_until_ready(
        instance_norm2d(x2, weight, bias, target_block_bytes=2048))
    ref2 = _reference(x2, weight, bias)
    assert jnp.allclose(out2, ref2, atol=1e-5, rtol=1e-5), "masked fallback mismatch"

    print("KERNEL_OK")
</pallas_src>

<mosaic_0001>
module attributes {stable_mosaic.version = 11 : i64} {
  func.func @_instnorm_fused_kernel(%arg0: i32, %arg1: memref<8x256xf32, #tpu.memory_space<vmem>>, %arg2: memref<8x2xf32, #tpu.memory_space<vmem>>, %arg3: memref<8x256xf32, #tpu.memory_space<vmem>>) attributes {dimension_semantics = [#tpu.dimension_semantics<parallel>], iteration_bounds = array<i64: 1>, scalar_prefetch = 0 : i64, scratch_operands = 0 : i64, tpu.core_type = #tpu.core_type<tc>, window_params = [{transform_indices = @transform_0, window_bounds = array<i64: 8, 256>}, {transform_indices = @transform_1, window_bounds = array<i64: 8, 2>}, {transform_indices = @transform_2, window_bounds = array<i64: 8, 256>}]} {
    %c0 = arith.constant 0 : index
    %c0_0 = arith.constant 0 : index
    %0 = vector.load %arg1[%c0, %c0_0] : memref<8x256xf32, #tpu.memory_space<vmem>>, vector<8x256xf32>
    %cst = arith.constant dense<0.000000e+00> : vector<8xf32>
    %1 = vector.multi_reduction <add>, %0, %cst [1] : vector<8x256xf32> to vector<8xf32>
    %2 = vector.shape_cast %1 : vector<8xf32> to vector<8x1xf32>
    %3 = arith.mulf %0, %0 : vector<8x256xf32>
    %cst_1 = arith.constant dense<0.000000e+00> : vector<8xf32>
    %4 = vector.multi_reduction <add>, %3, %cst_1 [1] : vector<8x256xf32> to vector<8xf32>
    %5 = vector.shape_cast %4 : vector<8xf32> to vector<8x1xf32>
    %cst_2 = arith.constant 3.906250e-03 : f32
    %6 = vector.broadcast %cst_2 : f32 to vector<8x1xf32>
    %7 = arith.mulf %2, %6 : vector<8x1xf32>
    %cst_3 = arith.constant 3.906250e-03 : f32
    %8 = vector.broadcast %cst_3 : f32 to vector<8x1xf32>
    %9 = arith.mulf %5, %8 : vector<8x1xf32>
    %10 = arith.mulf %7, %7 : vector<8x1xf32>
    %11 = arith.subf %9, %10 : vector<8x1xf32>
    %cst_4 = arith.constant 0.000000e+00 : f32
    %12 = vector.broadcast %cst_4 : f32 to vector<8x1xf32>
    %13 = arith.maximumf %11, %12 : vector<8x1xf32>
    %cst_5 = arith.constant 1.000000e-10 : f32
    %14 = vector.broadcast %cst_5 : f32 to vector<8x1xf32>
    %15 = arith.addf %13, %14 : vector<8x1xf32>
    %16 = math.rsqrt %15 : vector<8x1xf32>
    %c0_6 = arith.constant 0 : index
    %c0_7 = arith.constant 0 : index
    %17 = vector.load %arg2[%c0_6, %c0_7] : memref<8x2xf32, #tpu.memory_space<vmem>>, vector<8x2xf32>
    %18 = vector.extract_strided_slice %17 {offsets = [0, 0], sizes = [8, 1], strides = [1, 1]} : vector<8x2xf32> to vector<8x1xf32>
    %19 = arith.mulf %18, %16 : vector<8x1xf32>
    %20 = vector.extract_strided_slice %17 {offsets = [0, 1], sizes = [8, 1], strides = [1, 1]} : vector<8x2xf32> to vector<8x1xf32>
    %21 = arith.mulf %7, %19 : vector<8x1xf32>
    %22 = arith.subf %20, %21 : vector<8x1xf32>
    %23 = vector.broadcast %19 : vector<8x1xf32> to vector<8x256xf32>
    %24 = arith.mulf %0, %23 : vector<8x256xf32>
    %25 = vector.broadcast %22 : vector<8x1xf32> to vector<8x256xf32>
    %26 = arith.addf %24, %25 : vector<8x256xf32>
    %c0_8 = arith.constant 0 : index
    %c0_9 = arith.constant 0 : index
    %27 = vector.load %arg3[%c0_8, %c0_9] : memref<8x256xf32, #tpu.memory_space<vmem>>, vector<8x256xf32>
    tpu.vector_store %arg3[%c0_8, %c0_9], %26 {strides = array<i32>} : memref<8x256xf32, #tpu.memory_space<vmem>>, vector<8x256xf32>,
    return
  }
  func.func @transform_0(%arg0: i32) -> (i32, i32) {
    %c0_i32 = arith.constant 0 : i32
    %c0_i32_0 = arith.constant 0 : i32
    return %arg0, %c0_i32 : i32, i32
  }
  func.func @transform_1(%arg0: i32) -> (i32, i32) {
    %c0_i32 = arith.constant 0 : i32
    %c0_i32_0 = arith.constant 0 : i32
    return %arg0, %c0_i32 : i32, i32
  }
  func.func @transform_2(%arg0: i32) -> (i32, i32) {
    %c0_i32 = arith.constant 0 : i32
    %c0_i32_0 = arith.constant 0 : i32
    return %arg0, %c0_i32 : i32, i32
  }
}

</mosaic_0001>

<llo_original>
// kernel: tpu_custom_call.1
$region0: #{tpu_custom_call.1}
  #allocation0 [shape = 'u32[]', space=smem, size = 0x4, offset = 0x4, fixed_abs, tag = 'smem constant byte address 0x4 - core index']
  #allocation1 [shape = 'u32[144,128]{1,0:T(1,128)}', space=vmem, size = 0x12000, scoped, tag = 'internal scratch']
  %s0 = inlined_call_operand.hbm [shape: f32[8,256], index: 0, kind: input, shape index: {}]
  %s1 = inlined_call_operand.vmem [shape: f32[8,2], index: 1, kind: input, shape index: {}]
  %s2 = inlined_call_operand.hbm [shape: f32[8,256], index: 2, kind: output, shape index: {}]
  %s3 = sld [smem:[#allocation0]]
  $region22: #{tpu_custom_call.1} parent=0
    _
  %s5 = ssub.s32 1, %s3
  %s6 = scalar_select 0, %s5, %s3
  $region1: #{tpu_custom_call.1} parent=0
    #allocation2 [shape = 'u8[8192]{0}', space=vmem, size = 0x2000, scoped, tag = 'input window, operand 0, single buffered']
    #allocation3 [shape = 's32[1]{0}', space=sflag, size = 0x4, scoped, tag = 'scoped memory for tpu_custom_call.1']
    #allocation4 [shape = 's32[1]{0}', space=sflag, size = 0x4, scoped, tag = 'scoped memory for tpu_custom_call.1']
    #allocation5 [shape = 'u8[8192]{0}', space=vmem, size = 0x2000, scoped, tag = 'output window, operand 0, single buffered']
    %7 = vsyncpa [#allocation3], 0
    %8 = vsyncpa [#allocation4], 0
    // Predicated region
    $region2: #{tpu_custom_call.1} parent=1 // pred_check
      _
    $region3: #{tpu_custom_call.1} parent=1 // pred_check_branch
      %10 = sbr.rel (0) target = $region5
    $region4: #{tpu_custom_call.1} parent=1 // pred_region
      %s12 = ssub.s32 256, 256
      %13 = vsyncadd [#allocation3], %s12
      %s15 = sshll.u32 [#allocation2], 4
      %s16 = int_to_ptr.vmem [resolvable:$true] %s15
      %18 = dma.hbm_to_vmem [thread:$0]  %s0, 256, %s16, [#allocation3]
    $region5: #{tpu_custom_call.1} parent=1 // pred_fallthru
      _
    // Predicated region
    $region6: #{tpu_custom_call.1} parent=1 // pred_check
      _
    $region7: #{tpu_custom_call.1} parent=1 // pred_check_branch
      %20 = sbr.rel (0) target = $region9
    $region8: #{tpu_custom_call.1} parent=1 // pred_region
      _
    $region9: #{tpu_custom_call.1} parent=1 // pred_fallthru
      _
    // Predicated region
    $region10: #{tpu_custom_call.1} parent=1 // pred_check
      _
    $region11: #{tpu_custom_call.1} parent=1 // pred_check_branch
      %22 = sbr.rel (0) target = $region13
    $region12: #{tpu_custom_call.1} parent=1 // pred_region
      %23 = dma.done [#allocation3], 256
    $region13: #{tpu_custom_call.1} parent=1 // pred_fallthru
      _
    %v24 = vld [vmem:[#allocation2] sm:$0xff]
    %v25 = vld [vmem:[#allocation2 + $0x8] sm:$0xff]
    %v26 = vadd.f32 %v24, %v25
    %27 = vadd.xlane.f32.xlu0 %v26
    %v28 = vpop.xlane.xlu0 %27
    %v29 = vmul.f32 %v24, %v24
    %v30 = vmul.f32 %v25, %v25
    %v31 = vadd.f32 %v29, %v30
    %32 = vadd.xlane.f32.xlu0 %v31
    %v33 = vpop.xlane.xlu0 %32
    %v34 = vmul.f32 %v28, 0.00390625
    %v35 = vmul.f32 %v33, 0.00390625
    %v36 = vmul.f32 %v34, %v34
    %v37 = vsub.f32 %v35, %v36
    %v38 = vmax.f32 %v37, 0.0
    %v39 = vadd.f32 %v38, 1e-10
    %v40 = vrsqrt.pop %v39
    %v41 = vld [vmem:[%s1] sm:$0xff]
    %v42 = vmul.f32 %v41, %v40
    %v43 = vmul.f32 %v34, %v42
    %45 = vrot.lane.b32.xlu0 %v43, 1
    %v46 = vpop.permute.xlu0 %45
    %v48 = vsub.f32 %v41, %v46
    %50 = vset.pattern.permute.xlu0 0
    %51 = vperm.xlu0 %50, %v42
    %v52 = vpop.permute.xlu0 %51
    %v54 = vmul.f32 %v24, %v52
    %v55 = vmul.f32 %v25, %v52
    %57 = vset.pattern.permute.xlu0 1
    %58 = vperm.xlu0 %57, %v48
    %v59 = vpop.permute.xlu0 %58
    %v61 = vadd.f32 %v54, %v59
    %v62 = vadd.f32 %v55, %v59
    %63 = vst [vmem:[#allocation5] sm:$0xff] %v61
    %64 = vst [vmem:[#allocation5 + $0x8] sm:$0xff] %v62
    // Predicated region
    $region14: #{tpu_custom_call.1} parent=1 // pred_check
      _
    $region15: #{tpu_custom_call.1} parent=1 // pred_check_branch
      %66 = sbr.rel (0) target = $region17
    $region16: #{tpu_custom_call.1} parent=1 // pred_region
      %s68 = ssub.s32 256, 256
      %69 = vsyncadd [#allocation4], %s68
      %s71 = sshll.u32 [#allocation5], 4
      %s72 = int_to_ptr.vmem [resolvable:$true] %s71
      %74 = dma.vmem_to_hbm [thread:$0]  %s72, 256, %s2, [#allocation4]
    $region17: #{tpu_custom_call.1} parent=1 // pred_fallthru
      _
    // Predicated region
    $region18: #{tpu_custom_call.1} parent=1 // pred_check
      _
    $region19: #{tpu_custom_call.1} parent=1 // pred_check_branch
      %76 = sbr.rel (0) target = $region21
    $region20: #{tpu_custom_call.1} parent=1 // pred_region
      %77 = dma.done [#allocation4], 256
    $region21: #{tpu_custom_call.1} parent=1 // pred_fallthru
      _
    %78 = vsyncpa [#allocation3], 1
    %79 = vsyncpa [#allocation4], 1

</llo_original>
